<compile_context>
chip_gen: v7x
topology: tpu7x:2x2x1
jax: 0.10.0
libtpu: 0.0.40
codegen_flags: <defaults>
</compile_context>

<pallas_src>
import jax
import jax.numpy as jnp
from jax.experimental import pallas as pl
from jax.experimental.pallas import tpu as pltpu


def _round_up(x, m):
    return ((x + m - 1) // m) * m


def _ae_kernel(x_ref, we_ref, be_ref, wd_ref, bd_ref, enc_ref, rec_ref):
    # One batch tile per grid step; both matmuls on the MXU (bf16 in, f32 acc),
    # bias add + ReLU on the VPU in f32.
    x = x_ref[...]                                                   # (TB, Dp) bf16
    enc_f32 = jnp.dot(x, we_ref[...], preferred_element_type=jnp.float32)
    enc_f32 = jnp.maximum(enc_f32 + be_ref[...], 0.0)                # f32 bias + ReLU

    enc = enc_f32.astype(enc_ref.dtype)                              # single cast
    enc_ref[...] = enc

    # Reuse the already-cast latent as the decoder matmul operand.
    rec_f32 = jnp.dot(enc.astype(wd_ref.dtype), wd_ref[...],
                      preferred_element_type=jnp.float32)
    rec_ref[...] = (rec_f32 + bd_ref[...]).astype(rec_ref.dtype)


def autoencoder_forward(x, w_enc, b_enc, w_dec, b_dec, *,
                        batch_tile=None, out_dtype=jnp.bfloat16):
    """Returns (x_encoded, x_reconstructed), matching Autoencoder.forward."""
    B, D = x.shape
    H = w_enc.shape[1]

    f32, bf16 = jnp.float32, jnp.bfloat16
    out_b = jnp.dtype(out_dtype).itemsize

    # Lane-dense padding of the feature dims (multiples of 128).
    Dp = _round_up(D, 128)
    Hp = _round_up(H, 128)
    # Batch padded only to the sublane multiple (8), never to the tile size.
    Bp = _round_up(B, 8)

    # --- Hardware-aware VMEM budget ------------------------------------------
    try:
        vmem_cap = int(pltpu.get_tpu_info().vmem_capacity_bytes)
    except Exception:
        vmem_cap = 64 * 1024 * 1024                       # conservative default
    # ~48 MiB on v7x (64 MiB/TC), ~96 MiB on v5e/v6e (128 MiB).
    vmem_limit = min((vmem_cap * 3) // 4, 100 * 1024 * 1024)

    if batch_tile is None:
        # Per-row VMEM bytes: double-buffered bf16 x tile, double-buffered
        # outputs, and the f32 intermediates living in the kernel body.
        per_row = (2 * 2 * Dp) + 2 * out_b * (Hp + Dp) + 4 * (Hp + Dp)
        weight_bytes = 2 * Dp * Hp + 2 * Hp * Dp + 4 * Hp + 4 * Dp
        budget = (vmem_limit * 7) // 10 - weight_bytes
        max_rows = max(8, (budget // per_row) // 8 * 8) if budget > 8 * per_row else 8
        batch_tile = min(2048, max_rows, Bp)
    batch_tile = max(8, _round_up(batch_tile, 8))

    # Guarantee >= 2 grid steps when the batch allows it (keeps both v7x
    # TensorCores busy via the "parallel" batch axis); harmless elsewhere.
    if Bp >= 16 and batch_tile >= Bp:
        batch_tile = max(8, (Bp // 2) // 8 * 8)
    batch_tile = min(batch_tile, Bp)

    grid = (pl.cdiv(Bp, batch_tile),)

    # --- Operand preparation (fast path skips the extra HBM pass over x) -----
    if B == Bp and D == Dp:
        xp = x.astype(bf16)
    else:
        xp = jnp.zeros((Bp, Dp), bf16).at[:B, :D].set(x.astype(bf16))
    if (D, H) == (Dp, Hp):
        wep = w_enc.astype(bf16)
        wdp = w_dec.astype(bf16)
        bep = b_enc.astype(f32).reshape(1, Hp)
        bdp = b_dec.astype(f32).reshape(1, Dp)
    else:
        wep = jnp.zeros((Dp, Hp), bf16).at[:D, :H].set(w_enc.astype(bf16))
        wdp = jnp.zeros((Hp, Dp), bf16).at[:H, :D].set(w_dec.astype(bf16))
        bep = jnp.zeros((1, Hp), f32).at[0, :H].set(b_enc.astype(f32))
        bdp = jnp.zeros((1, Dp), f32).at[0, :D].set(b_dec.astype(f32))

    out_shapes = (
        jax.ShapeDtypeStruct((Bp, Hp), out_dtype),
        jax.ShapeDtypeStruct((Bp, Dp), out_dtype),
    )

    cost = pl.CostEstimate(
        flops=4 * Bp * Dp * Hp,                          # two matmuls
        transcendentals=0,
        bytes_accessed=(Bp * Dp * 2                      # x (bf16)
                        + Dp * Hp * 2 + Hp * Dp * 2      # weights (bf16)
                        + Hp * 4 + Dp * 4                # biases (f32)
                        + Bp * Hp * out_b + Bp * Dp * out_b),  # outputs
    )

    def _run(single_buffer_weights):
        if single_buffer_weights:
            w_kw = dict(pipeline_mode=pl.Buffered(1))    # grid-invariant operands
        else:
            w_kw = {}
        call = pl.pallas_call(
            _ae_kernel,
            out_shape=out_shapes,
            grid_spec=pltpu.PrefetchScalarGridSpec(
                num_scalar_prefetch=0,
                grid=grid,
                in_specs=[
                    pl.BlockSpec((batch_tile, Dp), lambda i: (i, 0)),        # x tile
                    pl.BlockSpec((Dp, Hp), lambda i: (0, 0), **w_kw),        # W_enc
                    pl.BlockSpec((1, Hp), lambda i: (0, 0), **w_kw),         # b_enc
                    pl.BlockSpec((Hp, Dp), lambda i: (0, 0), **w_kw),        # W_dec
                    pl.BlockSpec((1, Dp), lambda i: (0, 0), **w_kw),         # b_dec
                ],
                out_specs=[
                    pl.BlockSpec((batch_tile, Hp), lambda i: (i, 0)),        # encoded
                    pl.BlockSpec((batch_tile, Dp), lambda i: (i, 0)),        # reconstructed
                ],
            ),
            compiler_params=pltpu.CompilerParams(
                dimension_semantics=("parallel",),
                vmem_limit_bytes=int(vmem_limit),
            ),
            cost_estimate=cost,
        )
        out = call(xp, wep, bep, wdp, bdp)
        return jax.block_until_ready(out)

    try:
        enc_p, rec_p = _run(True)
    except Exception:
        # Fallback if this jax version rejects Buffered(1) single-buffering.
        enc_p, rec_p = _run(False)

    # Slice away the batch / lane padding (no-op copy avoided when unpadded).
    enc = enc_p if (B, H) == (Bp, Hp) else enc_p[:B, :H]
    rec = rec_p if (B, D) == (Bp, Dp) else rec_p[:B, :D]
    return enc, rec


def _init_linear(key, fan_in, fan_out):
    """Deterministic PyTorch-style nn.Linear init: U(-1/sqrt(fan_in), +1/sqrt(fan_in))."""
    kw, kb = jax.random.split(key)
    bound = 1.0 / jnp.sqrt(fan_in)
    w = jax.random.uniform(kw, (fan_in, fan_out), jnp.float32, -bound, bound)
    b = jax.random.uniform(kb, (fan_out,), jnp.float32, -bound, bound)
    return w, b


if __name__ == "__main__":
    B, D, H = 16, 64, 32  # small shapes: batch=16, input dim=64, latent dim=32

    key = jax.random.PRNGKey(0)
    k_x, k_enc, k_dec = jax.random.split(key, 3)

    x = jax.random.normal(k_x, (B, D), jnp.float32)
    w_enc, b_enc = _init_linear(k_enc, D, H)
    w_dec, b_dec = _init_linear(k_dec, H, D)

    enc, rec = autoencoder_forward(x, w_enc, b_enc, w_dec, b_dec)
    jax.block_until_ready((enc, rec))

    assert enc.shape == (B, H) and rec.shape == (B, D)
    assert enc.dtype == jnp.bfloat16 and rec.dtype == jnp.bfloat16

    # Reference with the same precision policy (bf16 operands / f32 accumulate,
    # bf16 outputs, bf16 latent fed to the decoder).
    xb = x.astype(jnp.bfloat16)
    web = w_enc.astype(jnp.bfloat16)
    wdb = w_dec.astype(jnp.bfloat16)
    enc_ref = jnp.maximum(
        jnp.dot(xb, web, preferred_element_type=jnp.float32) + b_enc, 0.0
    ).astype(jnp.bfloat16)
    rec_ref = (jnp.dot(enc_ref, wdb, preferred_element_type=jnp.float32)
               + b_dec).astype(jnp.bfloat16)

    assert jnp.allclose(enc.astype(jnp.float32), enc_ref.astype(jnp.float32),
                        atol=2e-2, rtol=2e-2)
    assert jnp.allclose(rec.astype(jnp.float32), rec_ref.astype(jnp.float32),
                        atol=2e-2, rtol=2e-2)

    # Loose sanity check against pure-f32 math (bf16 rounding only).
    enc_f32 = jnp.maximum(x @ w_enc + b_enc, 0.0)
    rec_f32 = enc_f32 @ w_dec + b_dec
    assert jnp.allclose(enc.astype(jnp.float32), enc_f32, atol=1e-1, rtol=1e-1)
    assert jnp.allclose(rec.astype(jnp.float32), rec_f32, atol=1e-1, rtol=1e-1)

    # TODO(synk): fit()/predict() are host-side training/utility loops (optimizer,
    # DataLoader handling), not forward compute; not implemented as kernels.
    print("KERNEL_OK")
</pallas_src>

<mosaic_0001>
module attributes {stable_mosaic.version = 11 : i64} {
  func.func @_ae_kernel(%arg0: i32, %arg1: memref<8x128xbf16, #tpu.memory_space<vmem>>, %arg2: memref<128x128xbf16, #tpu.memory_space<vmem>>, %arg3: memref<1x128xf32, #tpu.memory_space<vmem>>, %arg4: memref<128x128xbf16, #tpu.memory_space<vmem>>, %arg5: memref<1x128xf32, #tpu.memory_space<vmem>>, %arg6: memref<8x128xbf16, #tpu.memory_space<vmem>>, %arg7: memref<8x128xbf16, #tpu.memory_space<vmem>>) attributes {dimension_semantics = [#tpu.dimension_semantics<parallel>], iteration_bounds = array<i64: 2>, scalar_prefetch = 0 : i64, scratch_operands = 0 : i64, tpu.core_type = #tpu.core_type<tc>, window_params = [{transform_indices = @transform_0, window_bounds = array<i64: 8, 128>}, {pipeline_mode = #tpu.pipeline_mode<synchronous>, transform_indices = @transform_1, window_bounds = array<i64: 128, 128>}, {pipeline_mode = #tpu.pipeline_mode<synchronous>, transform_indices = @transform_2, window_bounds = array<i64: 1, 128>}, {pipeline_mode = #tpu.pipeline_mode<synchronous>, transform_indices = @transform_3, window_bounds = array<i64: 128, 128>}, {pipeline_mode = #tpu.pipeline_mode<synchronous>, transform_indices = @transform_4, window_bounds = array<i64: 1, 128>}, {transform_indices = @transform_5, window_bounds = array<i64: 8, 128>}, {transform_indices = @transform_6, window_bounds = array<i64: 8, 128>}]} {
    %c0 = arith.constant 0 : index
    %c0_0 = arith.constant 0 : index
    %0 = vector.load %arg1[%c0, %c0_0] : memref<8x128xbf16, #tpu.memory_space<vmem>>, vector<8x128xbf16>
    %c0_1 = arith.constant 0 : index
    %c0_2 = arith.constant 0 : index
    %1 = vector.load %arg2[%c0_1, %c0_2] : memref<128x128xbf16, #tpu.memory_space<vmem>>, vector<128x128xbf16>
    %cst = arith.constant dense<0.000000e+00> : vector<8x128xf32>
    %2 = tpu.matmul %0, %1, %cst {dimension_numbers = #tpu.dot_dimension_numbers<[1], [0], [0], [1], [0, 0, 1, 1], [], []>} : vector<8x128xbf16>, vector<128x128xbf16>, vector<8x128xf32> -> vector<8x128xf32>
    %c0_3 = arith.constant 0 : index
    %c0_4 = arith.constant 0 : index
    %3 = vector.load %arg3[%c0_3, %c0_4] : memref<1x128xf32, #tpu.memory_space<vmem>>, vector<1x128xf32>
    %4 = vector.broadcast %3 : vector<1x128xf32> to vector<8x128xf32>
    %5 = arith.addf %2, %4 : vector<8x128xf32>
    %cst_5 = arith.constant 0.000000e+00 : f32
    %6 = vector.broadcast %cst_5 : f32 to vector<8x128xf32>
    %7 = arith.maximumf %5, %6 : vector<8x128xf32>
    %8 = arith.truncf %7 : vector<8x128xf32> to vector<8x128xbf16>
    %c0_6 = arith.constant 0 : index
    %c0_7 = arith.constant 0 : index
    %9 = vector.load %arg6[%c0_6, %c0_7] : memref<8x128xbf16, #tpu.memory_space<vmem>>, vector<8x128xbf16>
    tpu.vector_store %arg6[%c0_6, %c0_7], %8 {strides = array<i32>} : memref<8x128xbf16, #tpu.memory_space<vmem>>, vector<8x128xbf16>,
    %c0_8 = arith.constant 0 : index
    %c0_9 = arith.constant 0 : index
    %10 = vector.load %arg4[%c0_8, %c0_9] : memref<128x128xbf16, #tpu.memory_space<vmem>>, vector<128x128xbf16>
    %cst_10 = arith.constant dense<0.000000e+00> : vector<8x128xf32>
    %11 = tpu.matmul %8, %10, %cst_10 {dimension_numbers = #tpu.dot_dimension_numbers<[1], [0], [0], [1], [0, 0, 1, 1], [], []>} : vector<8x128xbf16>, vector<128x128xbf16>, vector<8x128xf32> -> vector<8x128xf32>
    %c0_11 = arith.constant 0 : index
    %c0_12 = arith.constant 0 : index
    %12 = vector.load %arg5[%c0_11, %c0_12] : memref<1x128xf32, #tpu.memory_space<vmem>>, vector<1x128xf32>
    %13 = vector.broadcast %12 : vector<1x128xf32> to vector<8x128xf32>
    %14 = arith.addf %11, %13 : vector<8x128xf32>
    %15 = arith.truncf %14 : vector<8x128xf32> to vector<8x128xbf16>
    %c0_13 = arith.constant 0 : index
    %c0_14 = arith.constant 0 : index
    %16 = vector.load %arg7[%c0_13, %c0_14] : memref<8x128xbf16, #tpu.memory_space<vmem>>, vector<8x128xbf16>
    tpu.vector_store %arg7[%c0_13, %c0_14], %15 {strides = array<i32>} : memref<8x128xbf16, #tpu.memory_space<vmem>>, vector<8x128xbf16>,
    return
  }
  func.func @transform_0(%arg0: i32) -> (i32, i32) {
    %c0_i32 = arith.constant 0 : i32
    %c0_i32_0 = arith.constant 0 : i32
    return %arg0, %c0_i32 : i32, i32
  }
  func.func @transform_1(%arg0: i32) -> (i32, i32) {
    %c0_i32 = arith.constant 0 : i32
    %c0_i32_0 = arith.constant 0 : i32
    %c0_i32_1 = arith.constant 0 : i32
    return %c0_i32, %c0_i32_0 : i32, i32
  }
  func.func @transform_2(%arg0: i32) -> (i32, i32) {
    %c0_i32 = arith.constant 0 : i32
    %c0_i32_0 = arith.constant 0 : i32
    %c0_i32_1 = arith.constant 0 : i32
    return %c0_i32, %c0_i32_0 : i32, i32
  }
  func.func @transform_3(%arg0: i32) -> (i32, i32) {
    %c0_i32 = arith.constant 0 : i32
    %c0_i32_0 = arith.constant 0 : i32
    %c0_i32_1 = arith.constant 0 : i32
    return %c0_i32, %c0_i32_0 : i32, i32
  }
  func.func @transform_4(%arg0: i32) -> (i32, i32) {
    %c0_i32 = arith.constant 0 : i32
    %c0_i32_0 = arith.constant 0 : i32
    %c0_i32_1 = arith.constant 0 : i32
    return %c0_i32, %c0_i32_0 : i32, i32
  }
  func.func @transform_5(%arg0: i32) -> (i32, i32) {
    %c0_i32 = arith.constant 0 : i32
    %c0_i32_0 = arith.constant 0 : i32
    return %arg0, %c0_i32 : i32, i32
  }
  func.func @transform_6(%arg0: i32) -> (i32, i32) {
    %c0_i32 = arith.constant 0 : i32
    %c0_i32_0 = arith.constant 0 : i32
    return %arg0, %c0_i32 : i32, i32
  }
}

module attributes {stable_mosaic.version = 11 : i64} {
  func.func @_ae_kernel(%arg0: i32, %arg1: memref<8x128xbf16, #tpu.memory_space<vmem>>, %arg2: memref<128x128xbf16, #tpu.memory_space<vmem>>, %arg3: memref<1x128xf32, #tpu.memory_space<vmem>>, %arg4: memref<128x128xbf16, #tpu.memory_space<vmem>>, %arg5: memref<1x128xf32, #tpu.memory_space<vmem>>, %arg6: memref<8x128xbf16, #tpu.memory_space<vmem>>, %arg7: memref<8x128xbf16, #tpu.memory_space<vmem>>) attributes {dimension_semantics = [#tpu.dimension_semantics<parallel>], iteration_bounds = array<i64: 2>, scalar_prefetch = 0 : i64, scratch_operands = 0 : i64, tpu.core_type = #tpu.core_type<tc>, window_params = [{transform_indices = @transform_0, window_bounds = array<i64: 8, 128>}, {pipeline_mode = #tpu.pipeline_mode<synchronous>, transform_indices = @transform_1, window_bounds = array<i64: 128, 128>}, {pipeline_mode = #tpu.pipeline_mode<synchronous>, transform_indices = @transform_2, window_bounds = array<i64: 1, 128>}, {pipeline_mode = #tpu.pipeline_mode<synchronous>, transform_indices = @transform_3, window_bounds = array<i64: 128, 128>}, {pipeline_mode = #tpu.pipeline_mode<synchronous>, transform_indices = @transform_4, window_bounds = array<i64: 1, 128>}, {transform_indices = @transform_5, window_bounds = array<i64: 8, 128>}, {transform_indices = @transform_6, window_bounds = array<i64: 8, 128>}]} {
    %c0 = arith.constant 0 : index
    %c0_0 = arith.constant 0 : index
    %0 = vector.load %arg1[%c0, %c0_0] : memref<8x128xbf16, #tpu.memory_space<vmem>>, vector<8x128xbf16>
    %c0_1 = arith.constant 0 : index
    %c0_2 = arith.constant 0 : index
    %1 = vector.load %arg2[%c0_1, %c0_2] : memref<128x128xbf16, #tpu.memory_space<vmem>>, vector<128x128xbf16>
    %cst = arith.constant dense<0.000000e+00> : vector<8x128xf32>
    %2 = tpu.matmul %0, %1, %cst {dimension_numbers = #tpu.dot_dimension_numbers<[1], [0], [0], [1], [0, 0, 1, 1], [], []>} : vector<8x128xbf16>, vector<128x128xbf16>, vector<8x128xf32> -> vector<8x128xf32>
    %c0_3 = arith.constant 0 : index
    %c0_4 = arith.constant 0 : index
    %3 = vector.load %arg3[%c0_3, %c0_4] : memref<1x128xf32, #tpu.memory_space<vmem>>, vector<1x128xf32>
    %4 = vector.broadcast %3 : vector<1x128xf32> to vector<8x128xf32>
    %5 = arith.addf %2, %4 : vector<8x128xf32>
    %cst_5 = arith.constant 0.000000e+00 : f32
    %6 = vector.broadcast %cst_5 : f32 to vector<8x128xf32>
    %7 = arith.maximumf %5, %6 : vector<8x128xf32>
    %8 = arith.truncf %7 : vector<8x128xf32> to vector<8x128xbf16>
    %c0_6 = arith.constant 0 : index
    %c0_7 = arith.constant 0 : index
    %9 = vector.load %arg6[%c0_6, %c0_7] : memref<8x128xbf16, #tpu.memory_space<vmem>>, vector<8x128xbf16>
    tpu.vector_store %arg6[%c0_6, %c0_7], %8 {strides = array<i32>} : memref<8x128xbf16, #tpu.memory_space<vmem>>, vector<8x128xbf16>,
    %c0_8 = arith.constant 0 : index
    %c0_9 = arith.constant 0 : index
    %10 = vector.load %arg4[%c0_8, %c0_9] : memref<128x128xbf16, #tpu.memory_space<vmem>>, vector<128x128xbf16>
    %cst_10 = arith.constant dense<0.000000e+00> : vector<8x128xf32>
    %11 = tpu.matmul %8, %10, %cst_10 {dimension_numbers = #tpu.dot_dimension_numbers<[1], [0], [0], [1], [0, 0, 1, 1], [], []>} : vector<8x128xbf16>, vector<128x128xbf16>, vector<8x128xf32> -> vector<8x128xf32>
    %c0_11 = arith.constant 0 : index
    %c0_12 = arith.constant 0 : index
    %12 = vector.load %arg5[%c0_11, %c0_12] : memref<1x128xf32, #tpu.memory_space<vmem>>, vector<1x128xf32>
    %13 = vector.broadcast %12 : vector<1x128xf32> to vector<8x128xf32>
    %14 = arith.addf %11, %13 : vector<8x128xf32>
    %15 = arith.truncf %14 : vector<8x128xf32> to vector<8x128xbf16>
    %c0_13 = arith.constant 0 : index
    %c0_14 = arith.constant 0 : index
    %16 = vector.load %arg7[%c0_13, %c0_14] : memref<8x128xbf16, #tpu.memory_space<vmem>>, vector<8x128xbf16>
    tpu.vector_store %arg7[%c0_13, %c0_14], %15 {strides = array<i32>} : memref<8x128xbf16, #tpu.memory_space<vmem>>, vector<8x128xbf16>,
    return
  }
  func.func @transform_0(%arg0: i32) -> (i32, i32) {
    %c0_i32 = arith.constant 0 : i32
    %c0_i32_0 = arith.constant 0 : i32
    return %arg0, %c0_i32 : i32, i32
  }
  func.func @transform_1(%arg0: i32) -> (i32, i32) {
    %c0_i32 = arith.constant 0 : i32
    %c0_i32_0 = arith.constant 0 : i32
    %c0_i32_1 = arith.constant 0 : i32
    return %c0_i32, %c0_i32_0 : i32, i32
  }
  func.func @transform_2(%arg0: i32) -> (i32, i32) {
    %c0_i32 = arith.constant 0 : i32
    %c0_i32_0 = arith.constant 0 : i32
    %c0_i32_1 = arith.constant 0 : i32
    return %c0_i32, %c0_i32_0 : i32, i32
  }
  func.func @transform_3(%arg0: i32) -> (i32, i32) {
    %c0_i32 = arith.constant 0 : i32
    %c0_i32_0 = arith.constant 0 : i32
    %c0_i32_1 = arith.constant 0 : i32
    return %c0_i32, %c0_i32_0 : i32, i32
  }
  func.func @transform_4(%arg0: i32) -> (i32, i32) {
    %c0_i32 = arith.constant 0 : i32
    %c0_i32_0 = arith.constant 0 : i32
    %c0_i32_1 = arith.constant 0 : i32
    return %c0_i32, %c0_i32_0 : i32, i32
  }
  func.func @transform_5(%arg0: i32) -> (i32, i32) {
    %c0_i32 = arith.constant 0 : i32
    %c0_i32_0 = arith.constant 0 : i32
    return %arg0, %c0_i32 : i32, i32
  }
  func.func @transform_6(%arg0: i32) -> (i32, i32) {
    %c0_i32 = arith.constant 0 : i32
    %c0_i32_0 = arith.constant 0 : i32
    return %arg0, %c0_i32 : i32, i32
  }
}

</mosaic_0001>

<llo_original>
// kernel: tpu_custom_call.1
$region0: #{tpu_custom_call.1}
  #allocation0 [shape = 'u32[]', space=smem, size = 0x4, offset = 0x4, fixed_abs, tag = 'smem constant byte address 0x4 - core index']
  #allocation1 [shape = 'u32[144,128]{1,0:T(1,128)}', space=vmem, size = 0x12000, scoped, tag = 'internal scratch']
  %s0 = inlined_call_operand.hbm [shape: bf16[16,128], index: 0, kind: input, shape index: {}]
  %s1 = inlined_call_operand.hbm [shape: bf16[128,128], index: 1, kind: input, shape index: {}]
  %s2 = inlined_call_operand.vmem [shape: f32[1,128], index: 2, kind: input, shape index: {}]
  %s3 = inlined_call_operand.hbm [shape: bf16[128,128], index: 3, kind: input, shape index: {}]
  %s4 = inlined_call_operand.vmem [shape: f32[1,128], index: 4, kind: input, shape index: {}]
  %s5 = inlined_call_operand.hbm [shape: bf16[16,128], index: 5, kind: output, shape index: {0}]
  %s6 = inlined_call_operand.hbm [shape: bf16[16,128], index: 6, kind: output, shape index: {1}]
  %7 = xla_tuple %s5, %s6
  %s8 = sld [smem:[#allocation0]]
  $region73: #{tpu_custom_call.1} parent=0
    _
  %s10 = ssub.s32 1, %s8
  %s11 = scalar_select 0, %s10, %s8
  $region1: #{tpu_custom_call.1} parent=0
    #allocation2 [shape = 'u8[4096]{0}', space=vmem, size = 0x1000, scoped, tag = 'input window, operand 0']
    #allocation3 [shape = 's32[2]{0}', space=sflag, size = 0x8, scoped, tag = 'scoped memory for tpu_custom_call.1']
    #allocation4 [shape = 's32[2]{0}', space=sflag, size = 0x8, scoped, tag = 'scoped memory for tpu_custom_call.1']
    #allocation5 [shape = 'u8[32768]{0}', space=vmem, size = 0x8000, scoped, tag = 'input window, operand 1, single buffered']
    #allocation6 [shape = 's32[1]{0}', space=sflag, size = 0x4, scoped, tag = 'scoped memory for tpu_custom_call.1']
    #allocation7 [shape = 'u8[32768]{0}', space=vmem, size = 0x8000, scoped, tag = 'input window, operand 3, single buffered']
    #allocation8 [shape = 'u8[4096]{0}', space=vmem, size = 0x1000, scoped, tag = 'output window, operand 0']
    #allocation9 [shape = 'u8[4096]{0}', space=vmem, size = 0x1000, scoped, tag = 'output window, operand 1']
    #allocation10 [shape = 's32[2]{0}', space=sflag, size = 0x8, scoped, tag = 'scoped memory for tpu_custom_call.1']
    %12 = vsyncpa [#allocation3], 0
    %s13 = scalar_lea.sflag [#allocation3], 1
    %14 = vsyncpa %s13, 0
    %15 = vsyncpa [#allocation6], 0
    %16 = vsyncpa [#allocation4], 0
    %s17 = scalar_lea.sflag [#allocation4], 1
    %18 = vsyncpa %s17, 0
    %19 = vsyncpa [#allocation10], 0
    %s20 = scalar_lea.sflag [#allocation10], 1
    %21 = vsyncpa %s20, 0
    loop: start=0, step=1, limit=4
    $region2: #{tpu_custom_call.1} parent=1 // loop_pre_header
      _
    $region3: #{tpu_custom_call.1} parent=1 // loop_header
      %s23 = sphi 0, %s27
      %p24 = scmp.ge.s32.totalorder %s23, 4
      %s33 = sphi 0, %s35
      %s36 = sphi 0, %s33
      %s37 = sphi 0, %s36
      %s53 = sphi 0, %s37
      %s57 = sphi 0, %s57
      %s59 = sphi 0, %s57
      %s60 = sphi 0, %s59
      %s74 = sphi 0, %s60
      %s78 = sphi 0, %s78
      %s80 = sphi 0, %s78
      %s81 = sphi 0, %s80
      %s95 = sphi 0, %s81
      %s99 = sphi 0, %s99
      %s101 = sphi 0, %s99
      %s102 = sphi 0, %s101
      %s116 = sphi 0, %s102
      %s120 = sphi 0, %s120
      %s122 = sphi 0, %s120
      %s123 = sphi 0, %s122
      %s137 = sphi 0, %s123
      %s143 = sphi 0, %s145
      %s146 = sphi 0, %s143
      %s147 = sphi 0, %s146
      %s163 = sphi 0, %s147
      %s169 = sphi 0, %s171
      %s172 = sphi 0, %s169
      %s173 = sphi 0, %s172
      %s189 = sphi 0, %s173
    $region4: #{tpu_custom_call.1} parent=1 // loop_header_branch
      %26 = sbr.rel (%p24) target = $region8
    $region5: #{tpu_custom_call.1} parent=1 // loop_body
      %s28 = ssub.s32 %s23, 1
      %s29 = ssub.s32 %s23, 2
      %s30 = sadd.s32 %s23, 1
      %s31 = ssub.s32 %s23, %s30
      %p32 = scmp.eq.s32.totalorder %s31, 0
      %s34 = sadd.s32 %s33, 1
      %s35 = scalar_select %p32, %s33, %s34
      %p38 = pneg %p32
      %p39 = scmp.eq.s32.totalorder %s23, 1
      %p40 = por %p38, %p39
      %p41 = scmp.ne.s32.totalorder %s33, %s36
      %p42 = scmp.eq.s32.totalorder %s23, 0
      %p43 = por %p41, %p42
      %p44 = scmp.ne.s32.totalorder %s33, %s36
      %p45 = scmp.eq.s32.totalorder %s28, 1
      %p46 = por %p44, %p45
      %p47 = scmp.ne.s32.totalorder %s36, %s37
      %p48 = scmp.eq.s32.totalorder %s28, 0
      %p49 = por %p47, %p48
      %p50 = scmp.ne.s32.totalorder %s36, %s37
      %p51 = scmp.eq.s32.totalorder %s29, 1
      %p52 = por %p50, %p51
      %p54 = scmp.ne.s32.totalorder %s37, %s53
      %p55 = scmp.eq.s32.totalorder %s29, 0
      %p56 = por %p54, %p55
      %s58 = sadd.s32 %s57, 1
      %p61 = scmp.eq.s32.totalorder %s23, 1
      %p62 = scmp.ne.s32.totalorder %s57, %s59
      %p63 = scmp.eq.s32.totalorder %s23, 0
      %p64 = por %p62, %p63
      %p65 = scmp.ne.s32.totalorder %s57, %s59
      %p66 = scmp.eq.s32.totalorder %s28, 1
      %p67 = por %p65, %p66
      %p68 = scmp.ne.s32.totalorder %s59, %s60
      %p69 = scmp.eq.s32.totalorder %s28, 0
      %p70 = por %p68, %p69
      %p71 = scmp.ne.s32.totalorder %s59, %s60
      %p72 = scmp.eq.s32.totalorder %s29, 1
      %p73 = por %p71, %p72
      %p75 = scmp.ne.s32.totalorder %s60, %s74
      %p76 = scmp.eq.s32.totalorder %s29, 0
      %p77 = por %p75, %p76
      %s79 = sadd.s32 %s78, 1
      %p82 = scmp.eq.s32.totalorder %s23, 1
      %p83 = scmp.ne.s32.totalorder %s78, %s80
      %p84 = scmp.eq.s32.totalorder %s23, 0
      %p85 = por %p83, %p84
      %p86 = scmp.ne.s32.totalorder %s78, %s80
      %p87 = scmp.eq.s32.totalorder %s28, 1
      %p88 = por %p86, %p87
      %p89 = scmp.ne.s32.totalorder %s80, %s81
      %p90 = scmp.eq.s32.totalorder %s28, 0
      %p91 = por %p89, %p90
      %p92 = scmp.ne.s32.totalorder %s80, %s81
      %p93 = scmp.eq.s32.totalorder %s29, 1
      %p94 = por %p92, %p93
      %p96 = scmp.ne.s32.totalorder %s81, %s95
      %p97 = scmp.eq.s32.totalorder %s29, 0
      %p98 = por %p96, %p97
      %s100 = sadd.s32 %s99, 1
      %p103 = scmp.eq.s32.totalorder %s23, 1
      %p104 = scmp.ne.s32.totalorder %s99, %s101
      %p105 = scmp.eq.s32.totalorder %s23, 0
      %p106 = por %p104, %p105
      %p107 = scmp.ne.s32.totalorder %s99, %s101
      %p108 = scmp.eq.s32.totalorder %s28, 1
      %p109 = por %p107, %p108
      %p110 = scmp.ne.s32.totalorder %s101, %s102
      %p111 = scmp.eq.s32.totalorder %s28, 0
      %p112 = por %p110, %p111
      %p113 = scmp.ne.s32.totalorder %s101, %s102
      %p114 = scmp.eq.s32.totalorder %s29, 1
      %p115 = por %p113, %p114
      %p117 = scmp.ne.s32.totalorder %s102, %s116
      %p118 = scmp.eq.s32.totalorder %s29, 0
      %p119 = por %p117, %p118
      %s121 = sadd.s32 %s120, 1
      %p124 = scmp.eq.s32.totalorder %s23, 1
      %p125 = scmp.ne.s32.totalorder %s120, %s122
      %p126 = scmp.eq.s32.totalorder %s23, 0
      %p127 = por %p125, %p126
      %p128 = scmp.ne.s32.totalorder %s120, %s122
      %p129 = scmp.eq.s32.totalorder %s28, 1
      %p130 = por %p128, %p129
      %p131 = scmp.ne.s32.totalorder %s122, %s123
      %p132 = scmp.eq.s32.totalorder %s28, 0
      %p133 = por %p131, %p132
      %p134 = scmp.ne.s32.totalorder %s122, %s123
      %p135 = scmp.eq.s32.totalorder %s29, 1
      %p136 = por %p134, %p135
      %p138 = scmp.ne.s32.totalorder %s123, %s137
      %p139 = scmp.eq.s32.totalorder %s29, 0
      %p140 = por %p138, %p139
      %s141 = ssub.s32 %s23, %s30
      %p142 = scmp.eq.s32.totalorder %s141, 0
      %s144 = sadd.s32 %s143, 1
      %s145 = scalar_select %p142, %s143, %s144
      %p148 = pneg %p142
      %p149 = scmp.eq.s32.totalorder %s23, 1
      %p150 = por %p148, %p149
      %p151 = scmp.ne.s32.totalorder %s143, %s146
      %p152 = scmp.eq.s32.totalorder %s23, 0
      %p153 = por %p151, %p152
      %p154 = scmp.ne.s32.totalorder %s143, %s146
      %p155 = scmp.eq.s32.totalorder %s28, 1
      %p156 = por %p154, %p155
      %p157 = scmp.ne.s32.totalorder %s146, %s147
      %p158 = scmp.eq.s32.totalorder %s28, 0
      %p159 = por %p157, %p158
      %p160 = scmp.ne.s32.totalorder %s146, %s147
      %p161 = scmp.eq.s32.totalorder %s29, 1
      %p162 = por %p160, %p161
      %p164 = scmp.ne.s32.totalorder %s147, %s163
      %p165 = scmp.eq.s32.totalorder %s29, 0
      %p166 = por %p164, %p165
      %s167 = ssub.s32 %s23, %s30
      %p168 = scmp.eq.s32.totalorder %s167, 0
      %s170 = sadd.s32 %s169, 1
      %s171 = scalar_select %p168, %s169, %s170
      %p174 = pneg %p168
      %p175 = scmp.eq.s32.totalorder %s23, 1
      %p176 = por %p174, %p175
      %p177 = scmp.ne.s32.totalorder %s169, %s172
      %p178 = scmp.eq.s32.totalorder %s23, 0
      %p179 = por %p177, %p178
      %p180 = scmp.ne.s32.totalorder %s169, %s172
      %p181 = scmp.eq.s32.totalorder %s28, 1
      %p182 = por %p180, %p181
      %p183 = scmp.ne.s32.totalorder %s172, %s173
      %p184 = scmp.eq.s32.totalorder %s28, 0
      %p185 = por %p183, %p184
      %p186 = scmp.ne.s32.totalorder %s172, %s173
      %p187 = scmp.eq.s32.totalorder %s29, 1
      %p188 = por %p186, %p187
      %p190 = scmp.ne.s32.totalorder %s173, %s189
      %p191 = scmp.eq.s32.totalorder %s29, 0
      %p192 = por %p190, %p191
      %p193 = scmp.le.s32.totalorder 1, %s23
      %p194 = scmp.lt.s32.totalorder %s23, 3
      %p195 = pnand %p193, %p194
      %p196 = pneg %p195
      // Predicated region
      $region9: #{tpu_custom_call.1} parent=5 // pred_check
        _
      $region10: #{tpu_custom_call.1} parent=5 // pred_check_branch
        %198 = sbr.rel (%p195) target = $region12
      $region11: #{tpu_custom_call.1} parent=5 // pred_region
        %s199 = ssub.s32 %s23, 1
        // Predicated region
        $region13: #{tpu_custom_call.1} parent=11 // pred_check
          %p200 = pneg %p70
        $region14: #{tpu_custom_call.1} parent=11 // pred_check_branch
          %202 = sbr.rel (%p200) target = $region16
        $region15: #{tpu_custom_call.1} parent=11 // pred_region
          %s204 = ssub.s32 1024, 1024
          %205 = vsyncadd [#allocation6], %s204
          %s206 = sshll.u32 [#allocation5], 4
          %s207 = int_to_ptr.vmem [resolvable:$true] %s206
          %212 = dma.hbm_to_vmem [thread:$0]  %s1, 1024, %s207, [#allocation6], 64, 64, 4
        $region16: #{tpu_custom_call.1} parent=11 // pred_fallthru
          _
        // Predicated region
        $region17: #{tpu_custom_call.1} parent=11 // pred_check
          %p213 = pneg %p91
        $region18: #{tpu_custom_call.1} parent=11 // pred_check_branch
          %215 = sbr.rel (%p213) target = $region20
        $region19: #{tpu_custom_call.1} parent=11 // pred_region
          _
        $region20: #{tpu_custom_call.1} parent=11 // pred_fallthru
          _
        // Predicated region
        $region21: #{tpu_custom_call.1} parent=11 // pred_check
          %p216 = pneg %p112
        $region22: #{tpu_custom_call.1} parent=11 // pred_check_branch
          %218 = sbr.rel (%p216) target = $region24
        $region23: #{tpu_custom_call.1} parent=11 // pred_region
          %s220 = ssub.s32 1024, 1024
          %221 = vsyncadd [#allocation6], %s220
          %s222 = sshll.u32 [#allocation7], 4
          %s223 = int_to_ptr.vmem [resolvable:$true] %s222
          %228 = dma.hbm_to_vmem [thread:$0]  %s3, 1024, %s223, [#allocation6], 64, 64, 4
        $region24: #{tpu_custom_call.1} parent=11 // pred_fallthru
          _
        // Predicated region
        $region25: #{tpu_custom_call.1} parent=11 // pred_check
          %p229 = pneg %p133
        $region26: #{tpu_custom_call.1} parent=11 // pred_check_branch
          %231 = sbr.rel (%p229) target = $region28
        $region27: #{tpu_custom_call.1} parent=11 // pred_region
          _
        $region28: #{tpu_custom_call.1} parent=11 // pred_fallthru
          _
      $region12: #{tpu_custom_call.1} parent=5 // pred_fallthru
        _
      %p232 = scmp.lt.s32.totalorder %s23, 2
      // Predicated region
      $region29: #{tpu_custom_call.1} parent=5 // pred_check
        %p233 = pneg %p232
      $region30: #{tpu_custom_call.1} parent=5 // pred_check_branch
        %235 = sbr.rel (%p233) target = $region32
      $region31: #{tpu_custom_call.1} parent=5 // pred_region
        // Predicated region
        $region33: #{tpu_custom_call.1} parent=31 // pred_check
          %p236 = pneg %p43
        $region34: #{tpu_custom_call.1} parent=31 // pred_check_branch
          %238 = sbr.rel (%p236) target = $region36
        $region35: #{tpu_custom_call.1} parent=31 // pred_region
          %s239 = sand.u32 %s33, 1
          %s240 = scalar_lea.sflag [#allocation3], %s239
          %s241 = sand.u32 %s33, 1
          %s242 = smul.addr %s241, 4
          %s243 = scalar_lea.vmem [#allocation2], %s242
          %s245 = ssub.s32 64, 64
          %246 = vsyncadd %s240, %s245
          %s247 = smul.addr %s23, 64
          %s248 = scalar_lea.hbm %s0, %s247
          %s250 = sshll.u32 %s243, 4
          %s251 = int_to_ptr.vmem [resolvable:$true] %s250
          %253 = dma.hbm_to_vmem [thread:$0]  %s248, 64, %s251, %s240
        $region36: #{tpu_custom_call.1} parent=31 // pred_fallthru
          _
      $region32: #{tpu_custom_call.1} parent=5 // pred_fallthru
        _
      %p254 = scmp.le.s32.totalorder 1, %s23
      %p255 = scmp.lt.s32.totalorder %s23, 3
      %p256 = pnand %p254, %p255
      %p257 = pneg %p256
      // Predicated region
      $region37: #{tpu_custom_call.1} parent=5 // pred_check
        _
      $region38: #{tpu_custom_call.1} parent=5 // pred_check_branch
        %259 = sbr.rel (%p256) target = $region40
      $region39: #{tpu_custom_call.1} parent=5 // pred_region
        %s260 = ssub.s32 %s23, 1
        %s261 = sand.u32 %s36, 1
        %s262 = scalar_lea.sflag [#allocation3], %s261
        %s263 = sand.u32 %s36, 1
        %s264 = smul.addr %s263, 4
        %s265 = scalar_lea.vmem [#allocation2], %s264
        // Predicated region
        $region41: #{tpu_custom_call.1} parent=39 // pred_check
          %p266 = pneg %p49
        $region42: #{tpu_custom_call.1} parent=39 // pred_check_branch
          %268 = sbr.rel (%p266) target = $region44
        $region43: #{tpu_custom_call.1} parent=39 // pred_region
          %269 = dma.done %s262, 64
        $region44: #{tpu_custom_call.1} parent=39 // pred_fallthru
          _
        // Predicated region
        $region45: #{tpu_custom_call.1} parent=39 // pred_check
          %p270 = pneg %p70
        $region46: #{tpu_custom_call.1} parent=39 // pred_check_branch
          %272 = sbr.rel (%p270) target = $region48
        $region47: #{tpu_custom_call.1} parent=39 // pred_region
          %273 = dma.done [#allocation6], 1024
        $region48: #{tpu_custom_call.1} parent=39 // pred_fallthru
          _
        // Predicated region
        $region49: #{tpu_custom_call.1} parent=39 // pred_check
          %p274 = pneg %p112
        $region50: #{tpu_custom_call.1} parent=39 // pred_check_branch
          %276 = sbr.rel (%p274) target = $region52
        $region51: #{tpu_custom_call.1} parent=39 // pred_region
          %277 = dma.done [#allocation6], 1024
        $region52: #{tpu_custom_call.1} parent=39 // pred_fallthru
          _
        %s278 = sand.u32 %s36, 1
        %s279 = scalar_lea.sflag [#allocation3], %s278
        %s280 = sand.u32 %s36, 1
        %s281 = smul.addr %s280, 4
        %s282 = scalar_lea.vmem [#allocation2], %s281
        %p283 = pneg %p49
        %p284 = pneg %p46
        %p285 = pneg %p70
        %p286 = pneg %p67
        %p287 = pneg %p91
        %p288 = pneg %p88
        %p289 = pneg %p112
        %p290 = pneg %p109
        %p291 = pneg %p133
        %p292 = pneg %p130
        %p293 = pneg %p159
        %p294 = pneg %p156
        %s295 = sand.u32 %s146, 1
        %s296 = scalar_lea.sflag [#allocation4], %s295
        %s297 = sand.u32 %s146, 1
        %s298 = smul.addr %s297, 4
        %s299 = scalar_lea.vmem [#allocation8], %s298
        %p300 = pneg %p185
        %p301 = pneg %p182
        %s302 = sand.u32 %s172, 1
        %s303 = scalar_lea.sflag [#allocation10], %s302
        %s304 = sand.u32 %s172, 1
        %s305 = smul.addr %s304, 4
        %s306 = scalar_lea.vmem [#allocation9], %s305
        %v308 = vld [vmem:[%s265] sm:$0xf]
        %v309 = vld [vmem:[#allocation5] sm:$0xf]
        %v310 = vld [vmem:[#allocation5 + $0x4] sm:$0xf]
        %v311 = vld [vmem:[#allocation5 + $0x8] sm:$0xf]
        %v312 = vld [vmem:[#allocation5 + $0xc] sm:$0xf]
        %v313 = vld [vmem:[#allocation5 + $0x10] sm:$0xf]
        %v314 = vld [vmem:[#allocation5 + $0x14] sm:$0xf]
        %v315 = vld [vmem:[#allocation5 + $0x18] sm:$0xf]
        %v316 = vld [vmem:[#allocation5 + $0x1c] sm:$0xf]
        %v317 = vld [vmem:[#allocation5 + $0x20] sm:$0xf]
        %v318 = vld [vmem:[#allocation5 + $0x24] sm:$0xf]
        %v319 = vld [vmem:[#allocation5 + $0x28] sm:$0xf]
        %v320 = vld [vmem:[#allocation5 + $0x2c] sm:$0xf]
        %v321 = vld [vmem:[#allocation5 + $0x30] sm:$0xf]
        %v322 = vld [vmem:[#allocation5 + $0x34] sm:$0xf]
        %v323 = vld [vmem:[#allocation5 + $0x38] sm:$0xf]
        %v324 = vld [vmem:[#allocation5 + $0x3c] sm:$0xf]
        %v325 = vld [vmem:[%s2] sm:$0x1]
        %v327 = vlaneseq
        %v328 = vshrl.u32 %v327, 7
        %v329 = vsub.s32 0, %v328
        %v330 = vrot.slane %v325, %v329
        %v348 = vunpack.c.l.b16 %v309
        %v349 = vunpack.c.l.b16 %v310
        %v350 = vunpack.c.l.b16 %v311
        %v351 = vunpack.c.l.b16 %v312
        %v352 = vunpack.c.l.b16 %v313
        %v353 = vunpack.c.l.b16 %v314
        %v354 = vunpack.c.l.b16 %v315
        %v355 = vunpack.c.l.b16 %v316
        %v356 = vunpack.c.l.b16 %v317
        %v357 = vunpack.c.l.b16 %v318
        %v358 = vunpack.c.l.b16 %v319
        %v359 = vunpack.c.l.b16 %v320
        %v360 = vunpack.c.l.b16 %v321
        %v361 = vunpack.c.l.b16 %v322
        %v362 = vunpack.c.l.b16 %v323
        %v363 = vunpack.c.l.b16 %v324
        %v364 = vpack.c.b16 %v349, %v348
        %v365 = vpack.c.b16 %v351, %v350
        %v366 = vpack.c.b16 %v353, %v352
        %v367 = vpack.c.b16 %v355, %v354
        %v368 = vpack.c.b16 %v357, %v356
        %v369 = vpack.c.b16 %v359, %v358
        %v370 = vpack.c.b16 %v361, %v360
        %v371 = vpack.c.b16 %v363, %v362
        %380 = vmatprep.subr.bf16.mxu0 0
        %381 = vmatpush1.bf16.msra.mxu0 %v364
        %382 = vmatprep.subr.bf16.mxu0 0
        %383 = vmatpush1.bf16.msra.mxu0 %v365
        %384 = vmatprep.subr.bf16.mxu0 0
        %385 = vmatpush1.bf16.msra.mxu0 %v366
        %386 = vmatprep.subr.bf16.mxu0 0
        %387 = vmatpush1.bf16.msra.mxu0 %v367
        %388 = vmatprep.subr.bf16.mxu0 0
        %389 = vmatpush1.bf16.msra.mxu0 %v368
        %390 = vmatprep.subr.bf16.mxu0 0
        %391 = vmatpush1.bf16.msra.mxu0 %v369
        %392 = vmatprep.subr.bf16.mxu0 0
        %393 = vmatpush1.bf16.msra.mxu0 %v370
        %394 = vmatprep.subr.bf16.mxu0 0
        %395 = vmatpush1.bf16.msra.mxu0 %v371
        %396 = vmatprep.subr.bf16.mxu0 0
        %397 = vmatpush1.bf16.msra.mxu0 0
        %398 = vmatprep.subr.bf16.mxu0 0
        %399 = vmatpush1.bf16.msra.mxu0 0
        %400 = vmatprep.subr.bf16.mxu0 0
        %401 = vmatpush1.bf16.msra.mxu0 0
        %402 = vmatprep.subr.bf16.mxu0 0
        %403 = vmatpush1.bf16.msra.mxu0 0
        %404 = vmatprep.subr.bf16.mxu0 0
        %405 = vmatpush1.bf16.msra.mxu0 0
        %406 = vmatprep.subr.bf16.mxu0 0
        %407 = vmatpush1.bf16.msra.mxu0 0
        %408 = vmatprep.subr.bf16.mxu0 0
        %409 = vmatpush1.bf16.msra.mxu0 0
        %410 = vmatprep.subr.bf16.mxu0 0
        %411 = vmatpush1.bf16.msra.mxu0 0
        %412 = vmatprep.mubr.bf16.mxu0 0
        %413 = vmatmul.mubr.bf16.gmra.mrb[0].mxu0 %v308
        %v414 = vpop.f32.mrb[0].mxu0
        %v415 = vadd.f32 %v330, %v414
        %v416 = vpop.f32.mrb[0].mxu0
        %v417 = vpop.f32.mrb[0].mxu0
        %v418 = vpop.f32.mrb[0].mxu0
        %419 = vdwg.mxu0
        %v420 = vmax.f32 %v415, 0.0
        %v421 = vpack.c.bf16 %v420, %v420
        %422 = vst [vmem:[%s299] sm:$0xf] %v421
        %v423 = vld [vmem:[#allocation7] sm:$0xf]
        %v424 = vld [vmem:[#allocation7 + $0x4] sm:$0xf]
        %v425 = vld [vmem:[#allocation7 + $0x8] sm:$0xf]
        %v426 = vld [vmem:[#allocation7 + $0xc] sm:$0xf]
        %v427 = vld [vmem:[#allocation7 + $0x10] sm:$0xf]
        %v428 = vld [vmem:[#allocation7 + $0x14] sm:$0xf]
        %v429 = vld [vmem:[#allocation7 + $0x18] sm:$0xf]
        %v430 = vld [vmem:[#allocation7 + $0x1c] sm:$0xf]
        %v431 = vld [vmem:[#allocation7 + $0x20] sm:$0xf]
        %v432 = vld [vmem:[#allocation7 + $0x24] sm:$0xf]
        %v433 = vld [vmem:[#allocation7 + $0x28] sm:$0xf]
        %v434 = vld [vmem:[#allocation7 + $0x2c] sm:$0xf]
        %v435 = vld [vmem:[#allocation7 + $0x30] sm:$0xf]
        %v436 = vld [vmem:[#allocation7 + $0x34] sm:$0xf]
        %v437 = vld [vmem:[#allocation7 + $0x38] sm:$0xf]
        %v438 = vld [vmem:[#allocation7 + $0x3c] sm:$0xf]
        %v439 = vld [vmem:[%s4] sm:$0x1]
        %v441 = vlaneseq
        %v442 = vshrl.u32 %v441, 7
        %v443 = vsub.s32 0, %v442
        %v444 = vrot.slane %v439, %v443
        %v462 = vunpack.c.l.b16 %v423
        %v463 = vunpack.c.l.b16 %v424
        %v464 = vunpack.c.l.b16 %v425
        %v465 = vunpack.c.l.b16 %v426
        %v466 = vunpack.c.l.b16 %v427
        %v467 = vunpack.c.l.b16 %v428
        %v468 = vunpack.c.l.b16 %v429
        %v469 = vunpack.c.l.b16 %v430
        %v470 = vunpack.c.l.b16 %v431
        %v471 = vunpack.c.l.b16 %v432
        %v472 = vunpack.c.l.b16 %v433
        %v473 = vunpack.c.l.b16 %v434
        %v474 = vunpack.c.l.b16 %v435
        %v475 = vunpack.c.l.b16 %v436
        %v476 = vunpack.c.l.b16 %v437
        %v477 = vunpack.c.l.b16 %v438
        %v478 = vpack.c.b16 %v463, %v462
        %v479 = vpack.c.b16 %v465, %v464
        %v480 = vpack.c.b16 %v467, %v466
        %v481 = vpack.c.b16 %v469, %v468
        %v482 = vpack.c.b16 %v471, %v470
        %v483 = vpack.c.b16 %v473, %v472
        %v484 = vpack.c.b16 %v475, %v474
        %v485 = vpack.c.b16 %v477, %v476
        %494 = vmatprep.subr.bf16.mxu0 0
        %495 = vmatpush1.bf16.msra.mxu0 %v478
        %496 = vmatprep.subr.bf16.mxu0 0
        %497 = vmatpush1.bf16.msra.mxu0 %v479
        %498 = vmatprep.subr.bf16.mxu0 0
        %499 = vmatpush1.bf16.msra.mxu0 %v480
        %500 = vmatprep.subr.bf16.mxu0 0
        %501 = vmatpush1.bf16.msra.mxu0 %v481
        %502 = vmatprep.subr.bf16.mxu0 0
        %503 = vmatpush1.bf16.msra.mxu0 %v482
        %504 = vmatprep.subr.bf16.mxu0 0
        %505 = vmatpush1.bf16.msra.mxu0 %v483
        %506 = vmatprep.subr.bf16.mxu0 0
        %507 = vmatpush1.bf16.msra.mxu0 %v484
        %508 = vmatprep.subr.bf16.mxu0 0
        %509 = vmatpush1.bf16.msra.mxu0 %v485
        %510 = vmatprep.subr.bf16.mxu0 0
        %511 = vmatpush1.bf16.msra.mxu0 0
        %512 = vmatprep.subr.bf16.mxu0 0
        %513 = vmatpush1.bf16.msra.mxu0 0
        %514 = vmatprep.subr.bf16.mxu0 0
        %515 = vmatpush1.bf16.msra.mxu0 0
        %516 = vmatprep.subr.bf16.mxu0 0
        %517 = vmatpush1.bf16.msra.mxu0 0
        %518 = vmatprep.subr.bf16.mxu0 0
        %519 = vmatpush1.bf16.msra.mxu0 0
        %520 = vmatprep.subr.bf16.mxu0 0
        %521 = vmatpush1.bf16.msra.mxu0 0
        %522 = vmatprep.subr.bf16.mxu0 0
        %523 = vmatpush1.bf16.msra.mxu0 0
        %524 = vmatprep.subr.bf16.mxu0 0
        %525 = vmatpush1.bf16.msra.mxu0 0
        %526 = vmatprep.mubr.bf16.mxu0 0
        %527 = vmatmul.mubr.bf16.gmra.mrb[0].mxu0 %v421
        %v528 = vpop.f32.mrb[0].mxu0
        %v529 = vadd.f32 %v444, %v528
        %v530 = vpop.f32.mrb[0].mxu0
        %v531 = vpop.f32.mrb[0].mxu0
        %v532 = vpop.f32.mrb[0].mxu0
        %533 = vdwg.mxu0
        %v534 = vpack.c.bf16 %v529, %v529
        %535 = vst [vmem:[%s306] sm:$0xf] %v534
        %s536 = sand.u32 %s146, 1
        %s537 = scalar_lea.sflag [#allocation4], %s536
        %s538 = sand.u32 %s146, 1
        %s539 = smul.addr %s538, 4
        %s540 = scalar_lea.vmem [#allocation8], %s539
        %s541 = sand.u32 %s172, 1
        %s542 = scalar_lea.sflag [#allocation10], %s541
        %s543 = sand.u32 %s172, 1
        %s544 = smul.addr %s543, 4
        %s545 = scalar_lea.vmem [#allocation9], %s544
        // Predicated region
        $region53: #{tpu_custom_call.1} parent=39 // pred_check
          %p546 = pneg %p156
        $region54: #{tpu_custom_call.1} parent=39 // pred_check_branch
          %548 = sbr.rel (%p546) target = $region56
        $region55: #{tpu_custom_call.1} parent=39 // pred_region
          %s550 = ssub.s32 64, 64
          %551 = vsyncadd %s537, %s550
          %s552 = smul.addr %s28, 64
          %s553 = scalar_lea.hbm %s5, %s552
          %s555 = sshll.u32 %s540, 4
          %s556 = int_to_ptr.vmem [resolvable:$true] %s555
          %558 = dma.vmem_to_hbm [thread:$0]  %s556, 64, %s553, %s537
        $region56: #{tpu_custom_call.1} parent=39 // pred_fallthru
          _
        // Predicated region
        $region57: #{tpu_custom_call.1} parent=39 // pred_check
          %p559 = pneg %p182
        $region58: #{tpu_custom_call.1} parent=39 // pred_check_branch
          %561 = sbr.rel (%p559) target = $region60
        $region59: #{tpu_custom_call.1} parent=39 // pred_region
          %s563 = ssub.s32 64, 64
          %564 = vsyncadd %s542, %s563
          %s565 = smul.addr %s28, 64
          %s566 = scalar_lea.hbm %s6, %s565
          %s568 = sshll.u32 %s545, 4
          %s569 = int_to_ptr.vmem [resolvable:$true] %s568
          %571 = dma.vmem_to_hbm [thread:$0]  %s569, 64, %s566, %s542
        $region60: #{tpu_custom_call.1} parent=39 // pred_fallthru
          _
      $region40: #{tpu_custom_call.1} parent=5 // pred_fallthru
        _
      %p572 = scmp.le.s32.totalorder 2, %s23
      // Predicated region
      $region61: #{tpu_custom_call.1} parent=5 // pred_check
        %p573 = pneg %p572
      $region62: #{tpu_custom_call.1} parent=5 // pred_check_branch
        %575 = sbr.rel (%p573) target = $region64
      $region63: #{tpu_custom_call.1} parent=5 // pred_region
        %s576 = ssub.s32 %s23, 2
        // Predicated region
        $region65: #{tpu_custom_call.1} parent=63 // pred_check
          %p577 = pneg %p162
        $region66: #{tpu_custom_call.1} parent=63 // pred_check_branch
          %579 = sbr.rel (%p577) target = $region68
        $region67: #{tpu_custom_call.1} parent=63 // pred_region
          %s580 = sand.u32 %s147, 1
          %s581 = scalar_lea.sflag [#allocation4], %s580
          %s582 = sand.u32 %s147, 1
          %s583 = smul.addr %s582, 4
          %s584 = scalar_lea.vmem [#allocation8], %s583
          %585 = dma.done %s581, 64
        $region68: #{tpu_custom_call.1} parent=63 // pred_fallthru
          _
        // Predicated region
        $region69: #{tpu_custom_call.1} parent=63 // pred_check
          %p586 = pneg %p188
        $region70: #{tpu_custom_call.1} parent=63 // pred_check_branch
          %588 = sbr.rel (%p586) target = $region72
        $region71: #{tpu_custom_call.1} parent=63 // pred_region
          %s589 = sand.u32 %s173, 1
          %s590 = scalar_lea.sflag [#allocation10], %s589
          %s591 = sand.u32 %s173, 1
          %s592 = smul.addr %s591, 4
          %s593 = scalar_lea.vmem [#allocation9], %s592
          %594 = dma.done %s590, 64
        $region72: #{tpu_custom_call.1} parent=63 // pred_fallthru
          _
      $region64: #{tpu_custom_call.1} parent=5 // pred_fallthru
        _
    $region6: #{tpu_custom_call.1} parent=1 // loop_footer
      %s27 = sadd.s32 1, %s23
    $region7: #{tpu_custom_call.1} parent=1 // loop_footer_branch
      %22 = sbr.rel target = $region3
    $region8: #{tpu_custom_call.1} parent=1 // loop_exit
      _
    %595 = vsyncpa [#allocation3], 1
    %s596 = scalar_lea.sflag [#allocation3], 1
    %597 = vsyncpa %s596, 1
    %598 = vsyncpa [#allocation6], 1
    %599 = vsyncpa [#allocation4], 1
    %s600 = scalar_lea.sflag [#allocation4], 1
    %601 = vsyncpa %s600, 1
    %602 = vsyncpa [#allocation10], 1
    %s603 = scalar_lea.sflag [#allocation10], 1
    %604 = vsyncpa %s603, 1

// kernel: tpu_custom_call.1
$region0: #{tpu_custom_call.1}
  #allocation0 [shape = 'u32[]', space=smem, size = 0x4, offset = 0x4, fixed_abs, tag = 'smem constant byte address 0x4 - core index']
  #allocation1 [shape = 'u32[144,128]{1,0:T(1,128)}', space=vmem, size = 0x12000, scoped, tag = 'internal scratch']
  %s0 = inlined_call_operand.hbm [shape: bf16[16,128], index: 0, kind: input, shape index: {}]
  %s1 = inlined_call_operand.hbm [shape: bf16[128,128], index: 1, kind: input, shape index: {}]
  %s2 = inlined_call_operand.vmem [shape: f32[1,128], index: 2, kind: input, shape index: {}]
  %s3 = inlined_call_operand.hbm [shape: bf16[128,128], index: 3, kind: input, shape index: {}]
  %s4 = inlined_call_operand.vmem [shape: f32[1,128], index: 4, kind: input, shape index: {}]
  %s5 = inlined_call_operand.hbm [shape: bf16[16,128], index: 5, kind: output, shape index: {0}]
  %s6 = inlined_call_operand.hbm [shape: bf16[16,128], index: 6, kind: output, shape index: {1}]
  %7 = xla_tuple %s5, %s6
  %s8 = sld [smem:[#allocation0]]
  $region73: #{tpu_custom_call.1} parent=0
    _
  %s10 = ssub.s32 1, %s8
  %s11 = scalar_select 0, %s10, %s8
  $region1: #{tpu_custom_call.1} parent=0
    #allocation2 [shape = 'u8[4096]{0}', space=vmem, size = 0x1000, scoped, tag = 'input window, operand 0']
    #allocation3 [shape = 's32[2]{0}', space=sflag, size = 0x8, scoped, tag = 'scoped memory for tpu_custom_call.1']
    #allocation4 [shape = 's32[2]{0}', space=sflag, size = 0x8, scoped, tag = 'scoped memory for tpu_custom_call.1']
    #allocation5 [shape = 'u8[32768]{0}', space=vmem, size = 0x8000, scoped, tag = 'input window, operand 1, single buffered']
    #allocation6 [shape = 's32[1]{0}', space=sflag, size = 0x4, scoped, tag = 'scoped memory for tpu_custom_call.1']
    #allocation7 [shape = 'u8[32768]{0}', space=vmem, size = 0x8000, scoped, tag = 'input window, operand 3, single buffered']
    #allocation8 [shape = 'u8[4096]{0}', space=vmem, size = 0x1000, scoped, tag = 'output window, operand 0']
    #allocation9 [shape = 'u8[4096]{0}', space=vmem, size = 0x1000, scoped, tag = 'output window, operand 1']
    #allocation10 [shape = 's32[2]{0}', space=sflag, size = 0x8, scoped, tag = 'scoped memory for tpu_custom_call.1']
    %12 = vsyncpa [#allocation3], 0
    %s13 = scalar_lea.sflag [#allocation3], 1
    %14 = vsyncpa %s13, 0
    %15 = vsyncpa [#allocation6], 0
    %16 = vsyncpa [#allocation4], 0
    %s17 = scalar_lea.sflag [#allocation4], 1
    %18 = vsyncpa %s17, 0
    %19 = vsyncpa [#allocation10], 0
    %s20 = scalar_lea.sflag [#allocation10], 1
    %21 = vsyncpa %s20, 0
    loop: start=0, step=1, limit=4
    $region2: #{tpu_custom_call.1} parent=1 // loop_pre_header
      _
    $region3: #{tpu_custom_call.1} parent=1 // loop_header
      %s23 = sphi 0, %s27
      %p24 = scmp.ge.s32.totalorder %s23, 4
      %s33 = sphi 0, %s35
      %s36 = sphi 0, %s33
      %s37 = sphi 0, %s36
      %s53 = sphi 0, %s37
      %s57 = sphi 0, %s57
      %s59 = sphi 0, %s57
      %s60 = sphi 0, %s59
      %s74 = sphi 0, %s60
      %s78 = sphi 0, %s78
      %s80 = sphi 0, %s78
      %s81 = sphi 0, %s80
      %s95 = sphi 0, %s81
      %s99 = sphi 0, %s99
      %s101 = sphi 0, %s99
      %s102 = sphi 0, %s101
      %s116 = sphi 0, %s102
      %s120 = sphi 0, %s120
      %s122 = sphi 0, %s120
      %s123 = sphi 0, %s122
      %s137 = sphi 0, %s123
      %s143 = sphi 0, %s145
      %s146 = sphi 0, %s143
      %s147 = sphi 0, %s146
      %s163 = sphi 0, %s147
      %s169 = sphi 0, %s171
      %s172 = sphi 0, %s169
      %s173 = sphi 0, %s172
      %s189 = sphi 0, %s173
    $region4: #{tpu_custom_call.1} parent=1 // loop_header_branch
      %26 = sbr.rel (%p24) target = $region8
    $region5: #{tpu_custom_call.1} parent=1 // loop_body
      %s28 = ssub.s32 %s23, 1
      %s29 = ssub.s32 %s23, 2
      %s30 = sadd.s32 %s23, 1
      %s31 = ssub.s32 %s23, %s30
      %p32 = scmp.eq.s32.totalorder %s31, 0
      %s34 = sadd.s32 %s33, 1
      %s35 = scalar_select %p32, %s33, %s34
      %p38 = pneg %p32
      %p39 = scmp.eq.s32.totalorder %s23, 1
      %p40 = por %p38, %p39
      %p41 = scmp.ne.s32.totalorder %s33, %s36
      %p42 = scmp.eq.s32.totalorder %s23, 0
      %p43 = por %p41, %p42
      %p44 = scmp.ne.s32.totalorder %s33, %s36
      %p45 = scmp.eq.s32.totalorder %s28, 1
      %p46 = por %p44, %p45
      %p47 = scmp.ne.s32.totalorder %s36, %s37
      %p48 = scmp.eq.s32.totalorder %s28, 0
      %p49 = por %p47, %p48
      %p50 = scmp.ne.s32.totalorder %s36, %s37
      %p51 = scmp.eq.s32.totalorder %s29, 1
      %p52 = por %p50, %p51
      %p54 = scmp.ne.s32.totalorder %s37, %s53
      %p55 = scmp.eq.s32.totalorder %s29, 0
      %p56 = por %p54, %p55
      %s58 = sadd.s32 %s57, 1
      %p61 = scmp.eq.s32.totalorder %s23, 1
      %p62 = scmp.ne.s32.totalorder %s57, %s59
      %p63 = scmp.eq.s32.totalorder %s23, 0
      %p64 = por %p62, %p63
      %p65 = scmp.ne.s32.totalorder %s57, %s59
      %p66 = scmp.eq.s32.totalorder %s28, 1
      %p67 = por %p65, %p66
      %p68 = scmp.ne.s32.totalorder %s59, %s60
      %p69 = scmp.eq.s32.totalorder %s28, 0
      %p70 = por %p68, %p69
      %p71 = scmp.ne.s32.totalorder %s59, %s60
      %p72 = scmp.eq.s32.totalorder %s29, 1
      %p73 = por %p71, %p72
      %p75 = scmp.ne.s32.totalorder %s60, %s74
      %p76 = scmp.eq.s32.totalorder %s29, 0
      %p77 = por %p75, %p76
      %s79 = sadd.s32 %s78, 1
      %p82 = scmp.eq.s32.totalorder %s23, 1
      %p83 = scmp.ne.s32.totalorder %s78, %s80
      %p84 = scmp.eq.s32.totalorder %s23, 0
      %p85 = por %p83, %p84
      %p86 = scmp.ne.s32.totalorder %s78, %s80
      %p87 = scmp.eq.s32.totalorder %s28, 1
      %p88 = por %p86, %p87
      %p89 = scmp.ne.s32.totalorder %s80, %s81
      %p90 = scmp.eq.s32.totalorder %s28, 0
      %p91 = por %p89, %p90
      %p92 = scmp.ne.s32.totalorder %s80, %s81
      %p93 = scmp.eq.s32.totalorder %s29, 1
      %p94 = por %p92, %p93
      %p96 = scmp.ne.s32.totalorder %s81, %s95
      %p97 = scmp.eq.s32.totalorder %s29, 0
      %p98 = por %p96, %p97
      %s100 = sadd.s32 %s99, 1
      %p103 = scmp.eq.s32.totalorder %s23, 1
      %p104 = scmp.ne.s32.totalorder %s99, %s101
      %p105 = scmp.eq.s32.totalorder %s23, 0
      %p106 = por %p104, %p105
      %p107 = scmp.ne.s32.totalorder %s99, %s101
      %p108 = scmp.eq.s32.totalorder %s28, 1
      %p109 = por %p107, %p108
      %p110 = scmp.ne.s32.totalorder %s101, %s102
      %p111 = scmp.eq.s32.totalorder %s28, 0
      %p112 = por %p110, %p111
      %p113 = scmp.ne.s32.totalorder %s101, %s102
      %p114 = scmp.eq.s32.totalorder %s29, 1
      %p115 = por %p113, %p114
      %p117 = scmp.ne.s32.totalorder %s102, %s116
      %p118 = scmp.eq.s32.totalorder %s29, 0
      %p119 = por %p117, %p118
      %s121 = sadd.s32 %s120, 1
      %p124 = scmp.eq.s32.totalorder %s23, 1
      %p125 = scmp.ne.s32.totalorder %s120, %s122
      %p126 = scmp.eq.s32.totalorder %s23, 0
      %p127 = por %p125, %p126
      %p128 = scmp.ne.s32.totalorder %s120, %s122
      %p129 = scmp.eq.s32.totalorder %s28, 1
      %p130 = por %p128, %p129
      %p131 = scmp.ne.s32.totalorder %s122, %s123
      %p132 = scmp.eq.s32.totalorder %s28, 0
      %p133 = por %p131, %p132
      %p134 = scmp.ne.s32.totalorder %s122, %s123
      %p135 = scmp.eq.s32.totalorder %s29, 1
      %p136 = por %p134, %p135
      %p138 = scmp.ne.s32.totalorder %s123, %s137
      %p139 = scmp.eq.s32.totalorder %s29, 0
      %p140 = por %p138, %p139
      %s141 = ssub.s32 %s23, %s30
      %p142 = scmp.eq.s32.totalorder %s141, 0
      %s144 = sadd.s32 %s143, 1
      %s145 = scalar_select %p142, %s143, %s144
      %p148 = pneg %p142
      %p149 = scmp.eq.s32.totalorder %s23, 1
      %p150 = por %p148, %p149
      %p151 = scmp.ne.s32.totalorder %s143, %s146
      %p152 = scmp.eq.s32.totalorder %s23, 0
      %p153 = por %p151, %p152
      %p154 = scmp.ne.s32.totalorder %s143, %s146
      %p155 = scmp.eq.s32.totalorder %s28, 1
      %p156 = por %p154, %p155
      %p157 = scmp.ne.s32.totalorder %s146, %s147
      %p158 = scmp.eq.s32.totalorder %s28, 0
      %p159 = por %p157, %p158
      %p160 = scmp.ne.s32.totalorder %s146, %s147
      %p161 = scmp.eq.s32.totalorder %s29, 1
      %p162 = por %p160, %p161
      %p164 = scmp.ne.s32.totalorder %s147, %s163
      %p165 = scmp.eq.s32.totalorder %s29, 0
      %p166 = por %p164, %p165
      %s167 = ssub.s32 %s23, %s30
      %p168 = scmp.eq.s32.totalorder %s167, 0
      %s170 = sadd.s32 %s169, 1
      %s171 = scalar_select %p168, %s169, %s170
      %p174 = pneg %p168
      %p175 = scmp.eq.s32.totalorder %s23, 1
      %p176 = por %p174, %p175
      %p177 = scmp.ne.s32.totalorder %s169, %s172
      %p178 = scmp.eq.s32.totalorder %s23, 0
      %p179 = por %p177, %p178
      %p180 = scmp.ne.s32.totalorder %s169, %s172
      %p181 = scmp.eq.s32.totalorder %s28, 1
      %p182 = por %p180, %p181
      %p183 = scmp.ne.s32.totalorder %s172, %s173
      %p184 = scmp.eq.s32.totalorder %s28, 0
      %p185 = por %p183, %p184
      %p186 = scmp.ne.s32.totalorder %s172, %s173
      %p187 = scmp.eq.s32.totalorder %s29, 1
      %p188 = por %p186, %p187
      %p190 = scmp.ne.s32.totalorder %s173, %s189
      %p191 = scmp.eq.s32.totalorder %s29, 0
      %p192 = por %p190, %p191
      %p193 = scmp.le.s32.totalorder 1, %s23
      %p194 = scmp.lt.s32.totalorder %s23, 3
      %p195 = pnand %p193, %p194
      %p196 = pneg %p195
      // Predicated region
      $region9: #{tpu_custom_call.1} parent=5 // pred_check
        _
      $region10: #{tpu_custom_call.1} parent=5 // pred_check_branch
        %198 = sbr.rel (%p195) target = $region12
      $region11: #{tpu_custom_call.1} parent=5 // pred_region
        %s199 = ssub.s32 %s23, 1
        // Predicated region
        $region13: #{tpu_custom_call.1} parent=11 // pred_check
          %p200 = pneg %p70
        $region14: #{tpu_custom_call.1} parent=11 // pred_check_branch
          %202 = sbr.rel (%p200) target = $region16
        $region15: #{tpu_custom_call.1} parent=11 // pred_region
          %s204 = ssub.s32 1024, 1024
          %205 = vsyncadd [#allocation6], %s204
          %s206 = sshll.u32 [#allocation5], 4
          %s207 = int_to_ptr.vmem [resolvable:$true] %s206
          %212 = dma.hbm_to_vmem [thread:$0]  %s1, 1024, %s207, [#allocation6], 64, 64, 4
        $region16: #{tpu_custom_call.1} parent=11 // pred_fallthru
          _
        // Predicated region
        $region17: #{tpu_custom_call.1} parent=11 // pred_check
          %p213 = pneg %p91
        $region18: #{tpu_custom_call.1} parent=11 // pred_check_branch
          %215 = sbr.rel (%p213) target = $region20
        $region19: #{tpu_custom_call.1} parent=11 // pred_region
          _
        $region20: #{tpu_custom_call.1} parent=11 // pred_fallthru
          _
        // Predicated region
        $region21: #{tpu_custom_call.1} parent=11 // pred_check
          %p216 = pneg %p112
        $region22: #{tpu_custom_call.1} parent=11 // pred_check_branch
          %218 = sbr.rel (%p216) target = $region24
        $region23: #{tpu_custom_call.1} parent=11 // pred_region
          %s220 = ssub.s32 1024, 1024
          %221 = vsyncadd [#allocation6], %s220
          %s222 = sshll.u32 [#allocation7], 4
          %s223 = int_to_ptr.vmem [resolvable:$true] %s222
          %228 = dma.hbm_to_vmem [thread:$0]  %s3, 1024, %s223, [#allocation6], 64, 64, 4
        $region24: #{tpu_custom_call.1} parent=11 // pred_fallthru
          _
        // Predicated region
        $region25: #{tpu_custom_call.1} parent=11 // pred_check
          %p229 = pneg %p133
        $region26: #{tpu_custom_call.1} parent=11 // pred_check_branch
          %231 = sbr.rel (%p229) target = $region28
        $region27: #{tpu_custom_call.1} parent=11 // pred_region
          _
        $region28: #{tpu_custom_call.1} parent=11 // pred_fallthru
          _
      $region12: #{tpu_custom_call.1} parent=5 // pred_fallthru
        _
      %p232 = scmp.lt.s32.totalorder %s23, 2
      // Predicated region
      $region29: #{tpu_custom_call.1} parent=5 // pred_check
        %p233 = pneg %p232
      $region30: #{tpu_custom_call.1} parent=5 // pred_check_branch
        %235 = sbr.rel (%p233) target = $region32
      $region31: #{tpu_custom_call.1} parent=5 // pred_region
        // Predicated region
        $region33: #{tpu_custom_call.1} parent=31 // pred_check
          %p236 = pneg %p43
        $region34: #{tpu_custom_call.1} parent=31 // pred_check_branch
          %238 = sbr.rel (%p236) target = $region36
        $region35: #{tpu_custom_call.1} parent=31 // pred_region
          %s239 = sand.u32 %s33, 1
          %s240 = scalar_lea.sflag [#allocation3], %s239
          %s241 = sand.u32 %s33, 1
          %s242 = smul.addr %s241, 4
          %s243 = scalar_lea.vmem [#allocation2], %s242
          %s245 = ssub.s32 64, 64
          %246 = vsyncadd %s240, %s245
          %s247 = smul.addr %s23, 64
          %s248 = scalar_lea.hbm %s0, %s247
          %s250 = sshll.u32 %s243, 4
          %s251 = int_to_ptr.vmem [resolvable:$true] %s250
          %253 = dma.hbm_to_vmem [thread:$0]  %s248, 64, %s251, %s240
        $region36: #{tpu_custom_call.1} parent=31 // pred_fallthru
          _
      $region32: #{tpu_custom_call.1} parent=5 // pred_fallthru
        _
      %p254 = scmp.le.s32.totalorder 1, %s23
      %p255 = scmp.lt.s32.totalorder %s23, 3
      %p256 = pnand %p254, %p255
      %p257 = pneg %p256
      // Predicated region
      $region37: #{tpu_custom_call.1} parent=5 // pred_check
        _
      $region38: #{tpu_custom_call.1} parent=5 // pred_check_branch
        %259 = sbr.rel (%p256) target = $region40
      $region39: #{tpu_custom_call.1} parent=5 // pred_region
        %s260 = ssub.s32 %s23, 1
        %s261 = sand.u32 %s36, 1
        %s262 = scalar_lea.sflag [#allocation3], %s261
        %s263 = sand.u32 %s36, 1
        %s264 = smul.addr %s263, 4
        %s265 = scalar_lea.vmem [#allocation2], %s264
        // Predicated region
        $region41: #{tpu_custom_call.1} parent=39 // pred_check
          %p266 = pneg %p49
        $region42: #{tpu_custom_call.1} parent=39 // pred_check_branch
          %268 = sbr.rel (%p266) target = $region44
        $region43: #{tpu_custom_call.1} parent=39 // pred_region
          %269 = dma.done %s262, 64
        $region44: #{tpu_custom_call.1} parent=39 // pred_fallthru
          _
        // Predicated region
        $region45: #{tpu_custom_call.1} parent=39 // pred_check
          %p270 = pneg %p70
        $region46: #{tpu_custom_call.1} parent=39 // pred_check_branch
          %272 = sbr.rel (%p270) target = $region48
        $region47: #{tpu_custom_call.1} parent=39 // pred_region
          %273 = dma.done [#allocation6], 1024
        $region48: #{tpu_custom_call.1} parent=39 // pred_fallthru
          _
        // Predicated region
        $region49: #{tpu_custom_call.1} parent=39 // pred_check
          %p274 = pneg %p112
        $region50: #{tpu_custom_call.1} parent=39 // pred_check_branch
          %276 = sbr.rel (%p274) target = $region52
        $region51: #{tpu_custom_call.1} parent=39 // pred_region
          %277 = dma.done [#allocation6], 1024
        $region52: #{tpu_custom_call.1} parent=39 // pred_fallthru
          _
        %s278 = sand.u32 %s36, 1
        %s279 = scalar_lea.sflag [#allocation3], %s278
        %s280 = sand.u32 %s36, 1
        %s281 = smul.addr %s280, 4
        %s282 = scalar_lea.vmem [#allocation2], %s281
        %p283 = pneg %p49
        %p284 = pneg %p46
        %p285 = pneg %p70
        %p286 = pneg %p67
        %p287 = pneg %p91
        %p288 = pneg %p88
        %p289 = pneg %p112
        %p290 = pneg %p109
        %p291 = pneg %p133
        %p292 = pneg %p130
        %p293 = pneg %p159
        %p294 = pneg %p156
        %s295 = sand.u32 %s146, 1
        %s296 = scalar_lea.sflag [#allocation4], %s295
        %s297 = sand.u32 %s146, 1
        %s298 = smul.addr %s297, 4
        %s299 = scalar_lea.vmem [#allocation8], %s298
        %p300 = pneg %p185
        %p301 = pneg %p182
        %s302 = sand.u32 %s172, 1
        %s303 = scalar_lea.sflag [#allocation10], %s302
        %s304 = sand.u32 %s172, 1
        %s305 = smul.addr %s304, 4
        %s306 = scalar_lea.vmem [#allocation9], %s305
        %v308 = vld [vmem:[%s265] sm:$0xf]
        %v309 = vld [vmem:[#allocation5] sm:$0xf]
        %v310 = vld [vmem:[#allocation5 + $0x4] sm:$0xf]
        %v311 = vld [vmem:[#allocation5 + $0x8] sm:$0xf]
        %v312 = vld [vmem:[#allocation5 + $0xc] sm:$0xf]
        %v313 = vld [vmem:[#allocation5 + $0x10] sm:$0xf]
        %v314 = vld [vmem:[#allocation5 + $0x14] sm:$0xf]
        %v315 = vld [vmem:[#allocation5 + $0x18] sm:$0xf]
        %v316 = vld [vmem:[#allocation5 + $0x1c] sm:$0xf]
        %v317 = vld [vmem:[#allocation5 + $0x20] sm:$0xf]
        %v318 = vld [vmem:[#allocation5 + $0x24] sm:$0xf]
        %v319 = vld [vmem:[#allocation5 + $0x28] sm:$0xf]
        %v320 = vld [vmem:[#allocation5 + $0x2c] sm:$0xf]
        %v321 = vld [vmem:[#allocation5 + $0x30] sm:$0xf]
        %v322 = vld [vmem:[#allocation5 + $0x34] sm:$0xf]
        %v323 = vld [vmem:[#allocation5 + $0x38] sm:$0xf]
        %v324 = vld [vmem:[#allocation5 + $0x3c] sm:$0xf]
        %v325 = vld [vmem:[%s2] sm:$0x1]
        %v327 = vlaneseq
        %v328 = vshrl.u32 %v327, 7
        %v329 = vsub.s32 0, %v328
        %v330 = vrot.slane %v325, %v329
        %v348 = vunpack.c.l.b16 %v309
        %v349 = vunpack.c.l.b16 %v310
        %v350 = vunpack.c.l.b16 %v311
        %v351 = vunpack.c.l.b16 %v312
        %v352 = vunpack.c.l.b16 %v313
        %v353 = vunpack.c.l.b16 %v314
        %v354 = vunpack.c.l.b16 %v315
        %v355 = vunpack.c.l.b16 %v316
        %v356 = vunpack.c.l.b16 %v317
        %v357 = vunpack.c.l.b16 %v318
        %v358 = vunpack.c.l.b16 %v319
        %v359 = vunpack.c.l.b16 %v320
        %v360 = vunpack.c.l.b16 %v321
        %v361 = vunpack.c.l.b16 %v322
        %v362 = vunpack.c.l.b16 %v323
        %v363 = vunpack.c.l.b16 %v324
        %v364 = vpack.c.b16 %v349, %v348
        %v365 = vpack.c.b16 %v351, %v350
        %v366 = vpack.c.b16 %v353, %v352
        %v367 = vpack.c.b16 %v355, %v354
        %v368 = vpack.c.b16 %v357, %v356
        %v369 = vpack.c.b16 %v359, %v358
        %v370 = vpack.c.b16 %v361, %v360
        %v371 = vpack.c.b16 %v363, %v362
        %380 = vmatprep.subr.bf16.mxu0 0
        %381 = vmatpush1.bf16.msra.mxu0 %v364
        %382 = vmatprep.subr.bf16.mxu0 0
        %383 = vmatpush1.bf16.msra.mxu0 %v365
        %384 = vmatprep.subr.bf16.mxu0 0
        %385 = vmatpush1.bf16.msra.mxu0 %v366
        %386 = vmatprep.subr.bf16.mxu0 0
        %387 = vmatpush1.bf16.msra.mxu0 %v367
        %388 = vmatprep.subr.bf16.mxu0 0
        %389 = vmatpush1.bf16.msra.mxu0 %v368
        %390 = vmatprep.subr.bf16.mxu0 0
        %391 = vmatpush1.bf16.msra.mxu0 %v369
        %392 = vmatprep.subr.bf16.mxu0 0
        %393 = vmatpush1.bf16.msra.mxu0 %v370
        %394 = vmatprep.subr.bf16.mxu0 0
        %395 = vmatpush1.bf16.msra.mxu0 %v371
        %396 = vmatprep.subr.bf16.mxu0 0
        %397 = vmatpush1.bf16.msra.mxu0 0
        %398 = vmatprep.subr.bf16.mxu0 0
        %399 = vmatpush1.bf16.msra.mxu0 0
        %400 = vmatprep.subr.bf16.mxu0 0
        %401 = vmatpush1.bf16.msra.mxu0 0
        %402 = vmatprep.subr.bf16.mxu0 0
        %403 = vmatpush1.bf16.msra.mxu0 0
        %404 = vmatprep.subr.bf16.mxu0 0
        %405 = vmatpush1.bf16.msra.mxu0 0
        %406 = vmatprep.subr.bf16.mxu0 0
        %407 = vmatpush1.bf16.msra.mxu0 0
        %408 = vmatprep.subr.bf16.mxu0 0
        %409 = vmatpush1.bf16.msra.mxu0 0
        %410 = vmatprep.subr.bf16.mxu0 0
        %411 = vmatpush1.bf16.msra.mxu0 0
        %412 = vmatprep.mubr.bf16.mxu0 0
        %413 = vmatmul.mubr.bf16.gmra.mrb[0].mxu0 %v308
        %v414 = vpop.f32.mrb[0].mxu0
        %v415 = vadd.f32 %v330, %v414
        %v416 = vpop.f32.mrb[0].mxu0
        %v417 = vpop.f32.mrb[0].mxu0
        %v418 = vpop.f32.mrb[0].mxu0
        %419 = vdwg.mxu0
        %v420 = vmax.f32 %v415, 0.0
        %v421 = vpack.c.bf16 %v420, %v420
        %422 = vst [vmem:[%s299] sm:$0xf] %v421
        %v423 = vld [vmem:[#allocation7] sm:$0xf]
        %v424 = vld [vmem:[#allocation7 + $0x4] sm:$0xf]
        %v425 = vld [vmem:[#allocation7 + $0x8] sm:$0xf]
        %v426 = vld [vmem:[#allocation7 + $0xc] sm:$0xf]
        %v427 = vld [vmem:[#allocation7 + $0x10] sm:$0xf]
        %v428 = vld [vmem:[#allocation7 + $0x14] sm:$0xf]
        %v429 = vld [vmem:[#allocation7 + $0x18] sm:$0xf]
        %v430 = vld [vmem:[#allocation7 + $0x1c] sm:$0xf]
        %v431 = vld [vmem:[#allocation7 + $0x20] sm:$0xf]
        %v432 = vld [vmem:[#allocation7 + $0x24] sm:$0xf]
        %v433 = vld [vmem:[#allocation7 + $0x28] sm:$0xf]
        %v434 = vld [vmem:[#allocation7 + $0x2c] sm:$0xf]
        %v435 = vld [vmem:[#allocation7 + $0x30] sm:$0xf]
        %v436 = vld [vmem:[#allocation7 + $0x34] sm:$0xf]
        %v437 = vld [vmem:[#allocation7 + $0x38] sm:$0xf]
        %v438 = vld [vmem:[#allocation7 + $0x3c] sm:$0xf]
        %v439 = vld [vmem:[%s4] sm:$0x1]
        %v441 = vlaneseq
        %v442 = vshrl.u32 %v441, 7
        %v443 = vsub.s32 0, %v442
        %v444 = vrot.slane %v439, %v443
        %v462 = vunpack.c.l.b16 %v423
        %v463 = vunpack.c.l.b16 %v424
        %v464 = vunpack.c.l.b16 %v425
        %v465 = vunpack.c.l.b16 %v426
        %v466 = vunpack.c.l.b16 %v427
        %v467 = vunpack.c.l.b16 %v428
        %v468 = vunpack.c.l.b16 %v429
        %v469 = vunpack.c.l.b16 %v430
        %v470 = vunpack.c.l.b16 %v431
        %v471 = vunpack.c.l.b16 %v432
        %v472 = vunpack.c.l.b16 %v433
        %v473 = vunpack.c.l.b16 %v434
        %v474 = vunpack.c.l.b16 %v435
        %v475 = vunpack.c.l.b16 %v436
        %v476 = vunpack.c.l.b16 %v437
        %v477 = vunpack.c.l.b16 %v438
        %v478 = vpack.c.b16 %v463, %v462
        %v479 = vpack.c.b16 %v465, %v464
        %v480 = vpack.c.b16 %v467, %v466
        %v481 = vpack.c.b16 %v469, %v468
        %v482 = vpack.c.b16 %v471, %v470
        %v483 = vpack.c.b16 %v473, %v472
        %v484 = vpack.c.b16 %v475, %v474
        %v485 = vpack.c.b16 %v477, %v476
        %494 = vmatprep.subr.bf16.mxu0 0
        %495 = vmatpush1.bf16.msra.mxu0 %v478
        %496 = vmatprep.subr.bf16.mxu0 0
        %497 = vmatpush1.bf16.msra.mxu0 %v479
        %498 = vmatprep.subr.bf16.mxu0 0
        %499 = vmatpush1.bf16.msra.mxu0 %v480
        %500 = vmatprep.subr.bf16.mxu0 0
        %501 = vmatpush1.bf16.msra.mxu0 %v481
        %502 = vmatprep.subr.bf16.mxu0 0
        %503 = vmatpush1.bf16.msra.mxu0 %v482
        %504 = vmatprep.subr.bf16.mxu0 0
        %505 = vmatpush1.bf16.msra.mxu0 %v483
        %506 = vmatprep.subr.bf16.mxu0 0
        %507 = vmatpush1.bf16.msra.mxu0 %v484
        %508 = vmatprep.subr.bf16.mxu0 0
        %509 = vmatpush1.bf16.msra.mxu0 %v485
        %510 = vmatprep.subr.bf16.mxu0 0
        %511 = vmatpush1.bf16.msra.mxu0 0
        %512 = vmatprep.subr.bf16.mxu0 0
        %513 = vmatpush1.bf16.msra.mxu0 0
        %514 = vmatprep.subr.bf16.mxu0 0
        %515 = vmatpush1.bf16.msra.mxu0 0
        %516 = vmatprep.subr.bf16.mxu0 0
        %517 = vmatpush1.bf16.msra.mxu0 0
        %518 = vmatprep.subr.bf16.mxu0 0
        %519 = vmatpush1.bf16.msra.mxu0 0
        %520 = vmatprep.subr.bf16.mxu0 0
        %521 = vmatpush1.bf16.msra.mxu0 0
        %522 = vmatprep.subr.bf16.mxu0 0
        %523 = vmatpush1.bf16.msra.mxu0 0
        %524 = vmatprep.subr.bf16.mxu0 0
        %525 = vmatpush1.bf16.msra.mxu0 0
        %526 = vmatprep.mubr.bf16.mxu0 0
        %527 = vmatmul.mubr.bf16.gmra.mrb[0].mxu0 %v421
        %v528 = vpop.f32.mrb[0].mxu0
        %v529 = vadd.f32 %v444, %v528
        %v530 = vpop.f32.mrb[0].mxu0
        %v531 = vpop.f32.mrb[0].mxu0
        %v532 = vpop.f32.mrb[0].mxu0
        %533 = vdwg.mxu0
        %v534 = vpack.c.bf16 %v529, %v529
        %535 = vst [vmem:[%s306] sm:$0xf] %v534
        %s536 = sand.u32 %s146, 1
        %s537 = scalar_lea.sflag [#allocation4], %s536
        %s538 = sand.u32 %s146, 1
        %s539 = smul.addr %s538, 4
        %s540 = scalar_lea.vmem [#allocation8], %s539
        %s541 = sand.u32 %s172, 1
        %s542 = scalar_lea.sflag [#allocation10], %s541
        %s543 = sand.u32 %s172, 1
        %s544 = smul.addr %s543, 4
        %s545 = scalar_lea.vmem [#allocation9], %s544
        // Predicated region
        $region53: #{tpu_custom_call.1} parent=39 // pred_check
          %p546 = pneg %p156
        $region54: #{tpu_custom_call.1} parent=39 // pred_check_branch
          %548 = sbr.rel (%p546) target = $region56
        $region55: #{tpu_custom_call.1} parent=39 // pred_region
          %s550 = ssub.s32 64, 64
          %551 = vsyncadd %s537, %s550
          %s552 = smul.addr %s28, 64
          %s553 = scalar_lea.hbm %s5, %s552
          %s555 = sshll.u32 %s540, 4
          %s556 = int_to_ptr.vmem [resolvable:$true] %s555
          %558 = dma.vmem_to_hbm [thread:$0]  %s556, 64, %s553, %s537
        $region56: #{tpu_custom_call.1} parent=39 // pred_fallthru
          _
        // Predicated region
        $region57: #{tpu_custom_call.1} parent=39 // pred_check
          %p559 = pneg %p182
        $region58: #{tpu_custom_call.1} parent=39 // pred_check_branch
          %561 = sbr.rel (%p559) target = $region60
        $region59: #{tpu_custom_call.1} parent=39 // pred_region
          %s563 = ssub.s32 64, 64
          %564 = vsyncadd %s542, %s563
          %s565 = smul.addr %s28, 64
          %s566 = scalar_lea.hbm %s6, %s565
          %s568 = sshll.u32 %s545, 4
          %s569 = int_to_ptr.vmem [resolvable:$true] %s568
          %571 = dma.vmem_to_hbm [thread:$0]  %s569, 64, %s566, %s542
        $region60: #{tpu_custom_call.1} parent=39 // pred_fallthru
          _
      $region40: #{tpu_custom_call.1} parent=5 // pred_fallthru
        _
      %p572 = scmp.le.s32.totalorder 2, %s23
      // Predicated region
      $region61: #{tpu_custom_call.1} parent=5 // pred_check
        %p573 = pneg %p572
      $region62: #{tpu_custom_call.1} parent=5 // pred_check_branch
        %575 = sbr.rel (%p573) target = $region64
      $region63: #{tpu_custom_call.1} parent=5 // pred_region
        %s576 = ssub.s32 %s23, 2
        // Predicated region
        $region65: #{tpu_custom_call.1} parent=63 // pred_check
          %p577 = pneg %p162
        $region66: #{tpu_custom_call.1} parent=63 // pred_check_branch
          %579 = sbr.rel (%p577) target = $region68
        $region67: #{tpu_custom_call.1} parent=63 // pred_region
          %s580 = sand.u32 %s147, 1
          %s581 = scalar_lea.sflag [#allocation4], %s580
          %s582 = sand.u32 %s147, 1
          %s583 = smul.addr %s582, 4
          %s584 = scalar_lea.vmem [#allocation8], %s583
          %585 = dma.done %s581, 64
        $region68: #{tpu_custom_call.1} parent=63 // pred_fallthru
          _
        // Predicated region
        $region69: #{tpu_custom_call.1} parent=63 // pred_check
          %p586 = pneg %p188
        $region70: #{tpu_custom_call.1} parent=63 // pred_check_branch
          %588 = sbr.rel (%p586) target = $region72
        $region71: #{tpu_custom_call.1} parent=63 // pred_region
          %s589 = sand.u32 %s173, 1
          %s590 = scalar_lea.sflag [#allocation10], %s589
          %s591 = sand.u32 %s173, 1
          %s592 = smul.addr %s591, 4
          %s593 = scalar_lea.vmem [#allocation9], %s592
          %594 = dma.done %s590, 64
        $region72: #{tpu_custom_call.1} parent=63 // pred_fallthru
          _
      $region64: #{tpu_custom_call.1} parent=5 // pred_fallthru
        _
    $region6: #{tpu_custom_call.1} parent=1 // loop_footer
      %s27 = sadd.s32 1, %s23
    $region7: #{tpu_custom_call.1} parent=1 // loop_footer_branch
      %22 = sbr.rel target = $region3
    $region8: #{tpu_custom_call.1} parent=1 // loop_exit
      _
    %595 = vsyncpa [#allocation3], 1
    %s596 = scalar_lea.sflag [#allocation3], 1
    %597 = vsyncpa %s596, 1
    %598 = vsyncpa [#allocation6], 1
    %599 = vsyncpa [#allocation4], 1
    %s600 = scalar_lea.sflag [#allocation4], 1
    %601 = vsyncpa %s600, 1
    %602 = vsyncpa [#allocation10], 1
    %s603 = scalar_lea.sflag [#allocation10], 1
    %604 = vsyncpa %s603, 1

</llo_original>
